<compile_context>
chip_gen: v7x
topology: tpu7x:2x2x1
jax: 0.10.0
libtpu: 0.0.40
codegen_flags: <defaults>
</compile_context>

<pallas_src>
import functools

import jax
import jax.numpy as jnp
from jax import lax
from jax.experimental import pallas as pl
from jax.experimental.pallas import tpu as pltpu

_VMEM_LIMIT_BYTES = 48 * 1024 * 1024    # fits under v7x's 64 MiB physical VMEM
_FAST_PATH_BYTES = 1 * 1024 * 1024      # per-input size below which pure JAX wins


def _default_block_bytes():
    """~2 MiB per input block on v7x (64 MiB VMEM), ~4 MiB on v5e/v6e (128 MiB)."""
    try:
        info = pltpu.get_tpu_info()
        vmem = getattr(info, "vmem_capacity_bytes", None)
    except Exception:                    # API unavailable: conservative default
        vmem = None
    if vmem is not None and vmem >= 100 * 1024 * 1024:
        return 4 * 1024 * 1024           # v5e / v6e: 128 MiB VMEM
    return 2 * 1024 * 1024               # v7x (or unknown): stay small


def _rec_loss_kernel(o_ref, t_ref, num_ref, den_ref, *,
                     tile_w, f_row, n_per_p, n_tiles, ragged, has_overhang):
    """Accumulate per-row sum(o*t) and sum(o+t) over feature tiles."""
    p = pl.program_id(0)                 # parallel split of the feature axis
    k = pl.program_id(1)                 # feature tile within this split
    tile_idx = p * n_per_p + k

    @pl.when(k == 0)
    def _():
        num_ref[...] = jnp.zeros_like(num_ref)
        den_ref[...] = jnp.zeros_like(den_ref)

    def accum(mask_tail):
        o = o_ref[...].astype(jnp.float32)
        t = t_ref[...].astype(jnp.float32)
        if mask_tail:
            # Mask BEFORE the mul/add: bytes past f_row in the edge HBM tile
            # are unspecified (possibly NaN/Inf) and must not enter either sum.
            start = (n_tiles - 1) * tile_w
            idx = lax.broadcasted_iota(jnp.int32, o.shape, 1)
            valid = (start + idx) < f_row
            o = jnp.where(valid, o, 0.0)
            t = jnp.where(valid, t, 0.0)
        num_ref[...] += jnp.sum(o * t, axis=1, keepdims=True)
        den_ref[...] += jnp.sum(o + t, axis=1, keepdims=True)

    if ragged:
        # Predicate the masking: only the single out-of-range tile pays for
        # the iota/compare/selects; all other tiles run the plain mul/add.
        # (tile_idx >= n_tiles, the clamped overhang iteration, hits neither.)
        @pl.when(tile_idx < n_tiles - 1)
        def _():
            accum(mask_tail=False)

        @pl.when(tile_idx == n_tiles - 1)
        def _():
            accum(mask_tail=True)
    elif has_overhang:
        @pl.when(tile_idx < n_tiles)
        def _():
            accum(mask_tail=False)
    else:
        accum(mask_tail=False)


def _row_split(batch, feat, itemsize):
    """Pick R (dividing feat) so batch*R fills the packed sublane height."""
    packing = max(1, 4 // max(1, itemsize))   # 1: 32-bit, 2: 16-bit, 4: 8-bit
    target = 8 * packing
    # Best: smallest R with batch*R an exact multiple of the packed height.
    for r in (1, 2, 4, 8, 16, 32):
        if feat % r == 0 and (batch * r) % target == 0:
            return r
    # Next best: smallest R that at least fills 8 (32-bit) sublanes.
    for r in (1, 2, 4, 8):
        if feat % r == 0 and batch * r >= 8:
            return r
    # Fallback: largest small power-of-two divisor of feat.
    for r in (8, 4, 2, 1):
        if feat % r == 0:
            return r
    return 1


def rec_loss(outputs, targets, *, small_input_fast_path=True,
             target_block_bytes=None):
    """Pallas implementation of RecLoss.forward (returns a float32 scalar)."""
    assert outputs.shape == targets.shape
    b = outputs.shape[0]
    f = 1
    for d in outputs.shape[1:]:
        f *= d

    itemsize = jnp.dtype(outputs.dtype).itemsize
    if small_input_fast_path and b * f * itemsize < _FAST_PATH_BYTES:
        # Launch + finalize overhead dominates for tiny inputs: pure JAX.
        return _rec_loss_ref(outputs, targets)

    # Sublane-filling row split; contiguous reshape only (no copy, no cast).
    r = _row_split(b, f, itemsize)
    rows = b * r
    f_row = f // r
    o = outputs.reshape(rows, f_row)
    t = targets.reshape(rows, f_row)

    # Feature tile width: lane-dense multiple of 128, sized from the actual
    # input itemsize (bf16/fp8 blocks carry the same HBM bytes as f32 ones).
    block_bytes = (_default_block_bytes() if target_block_bytes is None
                   else target_block_bytes)
    if f_row <= 128:
        tile_w = f_row                        # full (possibly <128) dim: legal
    else:
        max_w = (f_row // 128) * 128          # never exceed the array width
        tgt_w = max(128, (block_bytes // (rows * itemsize)) // 128 * 128)
        tile_w = min(tgt_w, max_w)
    n_tiles = pl.cdiv(f_row, tile_w)
    ragged = (f_row % tile_w) != 0

    # Unconditional 2-way split whenever there are >= 2 tiles: both v7x
    # TensorCores stream half the data; on single-TC chips the only cost is
    # (at most) one skipped overhang iteration.
    if n_tiles >= 2:
        n_par = 2
        n_per_p = pl.cdiv(n_tiles, 2)
    else:
        n_par = 1
        n_per_p = n_tiles
    has_overhang = n_par * n_per_p > n_tiles

    kernel = functools.partial(
        _rec_loss_kernel,
        tile_w=tile_w, f_row=f_row, n_per_p=n_per_p, n_tiles=n_tiles,
        ragged=ragged, has_overhang=has_overhang)

    def in_map(p, k):
        # Clamp the overhang iteration onto the last valid tile; its
        # accumulate is skipped inside the kernel.
        return (0, jnp.minimum(p * n_per_p + k, n_tiles - 1))

    num_out, den_out = pl.pallas_call(
        kernel,
        out_shape=(
            jax.ShapeDtypeStruct((n_par, rows, 1), jnp.float32),
            jax.ShapeDtypeStruct((n_par, rows, 1), jnp.float32),
        ),
        grid_spec=pltpu.PrefetchScalarGridSpec(
            num_scalar_prefetch=0,
            grid=(n_par, n_per_p),
            in_specs=[
                pl.BlockSpec((rows, tile_w), in_map),
                pl.BlockSpec((rows, tile_w), in_map),
            ],
            out_specs=[
                pl.BlockSpec((None, rows, 1), lambda p, k: (p, 0, 0)),
                pl.BlockSpec((None, rows, 1), lambda p, k: (p, 0, 0)),
            ],
        ),
        compiler_params=pltpu.CompilerParams(
            dimension_semantics=("parallel", "arbitrary"),
            vmem_limit_bytes=_VMEM_LIMIT_BYTES,
        ),
    )(o, t)

    # Finalize on tiny partials: split/lane sums -> per-batch sums -> loss.
    num_b = num_out.sum(axis=(0, 2)).reshape(b, r).sum(axis=1)
    den_b = den_out.sum(axis=(0, 2)).reshape(b, r).sum(axis=1)
    return jnp.mean(1.0 - 2.0 * num_b / den_b) * 10.0


def _rec_loss_ref(outputs, targets):
    b = outputs.shape[0]
    o = outputs.reshape(b, -1).astype(jnp.float32)
    t = targets.reshape(b, -1).astype(jnp.float32)
    loss = 1.0 - 2.0 * (o * t).sum(axis=1) / (o + t).sum(axis=1)
    return loss.mean() * 10.0


if __name__ == "__main__":
    key = jax.random.PRNGKey(0)
    k1, k2, k3, k4, k5, k6 = jax.random.split(key, 6)

    # 1) Main NCHW segmentation-style case (positive values, so den > 0 just
    #    like sigmoid outputs / binary masks). Fast path disabled so the
    #    Pallas kernel itself is exercised at this small size.
    x_shape = (2, 4, 16, 16)
    outputs = jax.nn.sigmoid(jax.random.normal(k1, x_shape, dtype=jnp.float32))
    targets = (jax.random.uniform(k2, x_shape, dtype=jnp.float32) > 0.5).astype(
        jnp.float32)
    got = jax.block_until_ready(
        rec_loss(outputs, targets, small_input_fast_path=False))
    want = jax.block_until_ready(_rec_loss_ref(outputs, targets))
    assert jnp.allclose(got, want, rtol=1e-5, atol=1e-5), (got, want)

    # 2) Ragged feature size (not a multiple of 128): exercises the predicated
    #    masked last tile and the 2-way parallel split (even tile count).
    y_shape = (2, 3, 18, 18)
    o2 = jax.nn.sigmoid(jax.random.normal(k3, y_shape, dtype=jnp.float32))
    t2 = (jax.random.uniform(k4, y_shape, dtype=jnp.float32) > 0.5).astype(
        jnp.float32)
    got2 = jax.block_until_ready(
        rec_loss(o2, t2, small_input_fast_path=False))
    want2 = jax.block_until_ready(_rec_loss_ref(o2, t2))
    assert jnp.allclose(got2, want2, rtol=1e-5, atol=1e-5), (got2, want2)

    # 3) Odd tile count (forced-small block): exercises the clamped index_map
    #    and the skipped overhang iteration of the unconditional 2-way split.
    z_shape = (2, 4, 16, 20)
    o3 = jax.nn.sigmoid(jax.random.normal(k5, z_shape, dtype=jnp.float32))
    t3 = (jax.random.uniform(k6, z_shape, dtype=jnp.float32) > 0.5).astype(
        jnp.float32)
    got3 = jax.block_until_ready(
        rec_loss(o3, t3, small_input_fast_path=False, target_block_bytes=1))
    want3 = jax.block_until_ready(_rec_loss_ref(o3, t3))
    assert jnp.allclose(got3, want3, rtol=1e-5, atol=1e-5), (got3, want3)

    # 4) Native bf16 inputs: no wrapper-side cast; kernel casts per block and
    #    accumulates in f32, rows split to fill the packed (16,128) layout.
    got4 = jax.block_until_ready(
        rec_loss(outputs.astype(jnp.bfloat16), targets.astype(jnp.bfloat16),
                 small_input_fast_path=False))
    want4 = jax.block_until_ready(
        _rec_loss_ref(outputs.astype(jnp.bfloat16),
                      targets.astype(jnp.bfloat16)))
    assert jnp.allclose(got4, want4, rtol=1e-4, atol=1e-4), (got4, want4)

    # 5) Small-input fast path (default): pure JAX, no pallas_call launch.
    got5 = jax.block_until_ready(rec_loss(outputs, targets))
    assert jnp.allclose(got5, want, rtol=1e-5, atol=1e-5), (got5, want)

    print("KERNEL_OK")
</pallas_src>

<mosaic_0001>
module attributes {stable_mosaic.version = 11 : i64} {
  func.func @_rec_loss_kernel(%arg0: i32, %arg1: i32, %arg2: memref<8x256xf32, #tpu.memory_space<vmem>>, %arg3: memref<8x256xf32, #tpu.memory_space<vmem>>, %arg4: memref<1x8x1xf32, #tpu.memory_space<vmem>>, %arg5: memref<1x8x1xf32, #tpu.memory_space<vmem>>) attributes {dimension_semantics = [#tpu.dimension_semantics<parallel>, #tpu.dimension_semantics<arbitrary>], iteration_bounds = array<i64: 1, 1>, scalar_prefetch = 0 : i64, scratch_operands = 0 : i64, tpu.core_type = #tpu.core_type<tc>, window_params = [{transform_indices = @transform_0, window_bounds = array<i64: 8, 256>}, {transform_indices = @transform_1, window_bounds = array<i64: 8, 256>}, {transform_indices = @transform_2, window_bounds = array<i64: 1, 8, 1>}, {transform_indices = @transform_3, window_bounds = array<i64: 1, 8, 1>}]} {
    %c0_i32 = arith.constant 0 : i32
    %0 = arith.cmpi eq, %arg1, %c0_i32 : i32
    %1 = arith.extui %0 : i1 to i32
    %c0_i32_0 = arith.constant 0 : i32
    %2 = arith.cmpi ne, %1, %c0_i32_0 : i32
    scf.if %2 {
      %cst_17 = arith.constant 0.000000e+00 : f32
      %23 = vector.broadcast %cst_17 : f32 to vector<8x1xf32>
      %c0_18 = arith.constant 0 : index
      %c0_19 = arith.constant 0 : index
      %c0_20 = arith.constant 0 : index
      %24 = vector.load %arg4[%c0_18, %c0_19, %c0_20] : memref<1x8x1xf32, #tpu.memory_space<vmem>>, vector<1x8x1xf32>
      %25 = vector.shape_cast %24 : vector<1x8x1xf32> to vector<8x1xf32>
      %26 = vector.shape_cast %23 : vector<8x1xf32> to vector<1x8x1xf32>
      tpu.vector_store %arg4[%c0_18, %c0_19, %c0_20], %26 {strides = array<i32>} : memref<1x8x1xf32, #tpu.memory_space<vmem>>, vector<1x8x1xf32>,
      %cst_21 = arith.constant 0.000000e+00 : f32
      %27 = vector.broadcast %cst_21 : f32 to vector<8x1xf32>
      %c0_22 = arith.constant 0 : index
      %c0_23 = arith.constant 0 : index
      %c0_24 = arith.constant 0 : index
      %28 = vector.load %arg5[%c0_22, %c0_23, %c0_24] : memref<1x8x1xf32, #tpu.memory_space<vmem>>, vector<1x8x1xf32>
      %29 = vector.shape_cast %28 : vector<1x8x1xf32> to vector<8x1xf32>
      %30 = vector.shape_cast %27 : vector<8x1xf32> to vector<1x8x1xf32>
      tpu.vector_store %arg5[%c0_22, %c0_23, %c0_24], %30 {strides = array<i32>} : memref<1x8x1xf32, #tpu.memory_space<vmem>>, vector<1x8x1xf32>,
    } else {
    }
    %c0 = arith.constant 0 : index
    %c0_1 = arith.constant 0 : index
    %3 = vector.load %arg2[%c0, %c0_1] : memref<8x256xf32, #tpu.memory_space<vmem>>, vector<8x256xf32>
    %c0_2 = arith.constant 0 : index
    %c0_3 = arith.constant 0 : index
    %4 = vector.load %arg3[%c0_2, %c0_3] : memref<8x256xf32, #tpu.memory_space<vmem>>, vector<8x256xf32>
    %c0_4 = arith.constant 0 : index
    %c0_5 = arith.constant 0 : index
    %c0_6 = arith.constant 0 : index
    %5 = vector.load %arg4[%c0_4, %c0_5, %c0_6] : memref<1x8x1xf32, #tpu.memory_space<vmem>>, vector<1x8x1xf32>
    %6 = vector.shape_cast %5 : vector<1x8x1xf32> to vector<8x1xf32>
    %7 = arith.mulf %3, %4 : vector<8x256xf32>
    %cst = arith.constant dense<0.000000e+00> : vector<8xf32>
    %8 = vector.multi_reduction <add>, %7, %cst [1] : vector<8x256xf32> to vector<8xf32>
    %9 = vector.shape_cast %8 : vector<8xf32> to vector<8x1xf32>
    %10 = arith.addf %6, %9 : vector<8x1xf32>
    %c0_7 = arith.constant 0 : index
    %c0_8 = arith.constant 0 : index
    %c0_9 = arith.constant 0 : index
    %11 = vector.load %arg4[%c0_7, %c0_8, %c0_9] : memref<1x8x1xf32, #tpu.memory_space<vmem>>, vector<1x8x1xf32>
    %12 = vector.shape_cast %11 : vector<1x8x1xf32> to vector<8x1xf32>
    %13 = vector.shape_cast %10 : vector<8x1xf32> to vector<1x8x1xf32>
    tpu.vector_store %arg4[%c0_7, %c0_8, %c0_9], %13 {strides = array<i32>} : memref<1x8x1xf32, #tpu.memory_space<vmem>>, vector<1x8x1xf32>,
    %c0_10 = arith.constant 0 : index
    %c0_11 = arith.constant 0 : index
    %c0_12 = arith.constant 0 : index
    %14 = vector.load %arg5[%c0_10, %c0_11, %c0_12] : memref<1x8x1xf32, #tpu.memory_space<vmem>>, vector<1x8x1xf32>
    %15 = vector.shape_cast %14 : vector<1x8x1xf32> to vector<8x1xf32>
    %16 = arith.addf %3, %4 : vector<8x256xf32>
    %cst_13 = arith.constant dense<0.000000e+00> : vector<8xf32>
    %17 = vector.multi_reduction <add>, %16, %cst_13 [1] : vector<8x256xf32> to vector<8xf32>
    %18 = vector.shape_cast %17 : vector<8xf32> to vector<8x1xf32>
    %19 = arith.addf %15, %18 : vector<8x1xf32>
    %c0_14 = arith.constant 0 : index
    %c0_15 = arith.constant 0 : index
    %c0_16 = arith.constant 0 : index
    %20 = vector.load %arg5[%c0_14, %c0_15, %c0_16] : memref<1x8x1xf32, #tpu.memory_space<vmem>>, vector<1x8x1xf32>
    %21 = vector.shape_cast %20 : vector<1x8x1xf32> to vector<8x1xf32>
    %22 = vector.shape_cast %19 : vector<8x1xf32> to vector<1x8x1xf32>
    tpu.vector_store %arg5[%c0_14, %c0_15, %c0_16], %22 {strides = array<i32>} : memref<1x8x1xf32, #tpu.memory_space<vmem>>, vector<1x8x1xf32>,
    return
  }
  func.func @transform_0(%arg0: i32, %arg1: i32) -> (i32, i32) {
    %c1_i32 = arith.constant 1 : i32
    %0 = arith.muli %arg0, %c1_i32 : i32
    %1 = arith.addi %0, %arg1 : i32
    %c0_i32 = arith.constant 0 : i32
    %2 = arith.minsi %1, %c0_i32 : i32
    %c0_i32_0 = arith.constant 0 : i32
    %c0_i32_1 = arith.constant 0 : i32
    return %c0_i32_0, %2 : i32, i32
  }
  func.func @transform_1(%arg0: i32, %arg1: i32) -> (i32, i32) {
    %c1_i32 = arith.constant 1 : i32
    %0 = arith.muli %arg0, %c1_i32 : i32
    %1 = arith.addi %0, %arg1 : i32
    %c0_i32 = arith.constant 0 : i32
    %2 = arith.minsi %1, %c0_i32 : i32
    %c0_i32_0 = arith.constant 0 : i32
    %c0_i32_1 = arith.constant 0 : i32
    return %c0_i32_0, %2 : i32, i32
  }
  func.func @transform_2(%arg0: i32, %arg1: i32) -> (i32, i32, i32) {
    %c0_i32 = arith.constant 0 : i32
    %c0_i32_0 = arith.constant 0 : i32
    %c0_i32_1 = arith.constant 0 : i32
    return %arg0, %c0_i32, %c0_i32_0 : i32, i32, i32
  }
  func.func @transform_3(%arg0: i32, %arg1: i32) -> (i32, i32, i32) {
    %c0_i32 = arith.constant 0 : i32
    %c0_i32_0 = arith.constant 0 : i32
    %c0_i32_1 = arith.constant 0 : i32
    return %arg0, %c0_i32, %c0_i32_0 : i32, i32, i32
  }
}

</mosaic_0001>

<llo_original>
// kernel: tpu_custom_call.1
$region0: #{tpu_custom_call.1}
  #allocation0 [shape = 'u32[]', space=smem, size = 0x4, offset = 0x4, fixed_abs, tag = 'smem constant byte address 0x4 - core index']
  #allocation1 [shape = 'u32[144,128]{1,0:T(1,128)}', space=vmem, size = 0x12000, scoped, tag = 'internal scratch']
  %s0 = inlined_call_operand.hbm [shape: f32[8,256], index: 0, kind: input, shape index: {}]
  %s1 = inlined_call_operand.hbm [shape: f32[8,256], index: 1, kind: input, shape index: {}]
  %s2 = inlined_call_operand.vmem [shape: f32[1,8,1], index: 2, kind: output, shape index: {0}]
  %s3 = inlined_call_operand.vmem [shape: f32[1,8,1], index: 3, kind: output, shape index: {1}]
  %4 = xla_tuple %s2, %s3
  %s5 = sld [smem:[#allocation0]]
  $region38: #{tpu_custom_call.1} parent=0
    _
  %s7 = ssub.s32 1, %s5
  %s8 = scalar_select 0, %s7, %s5
  $region1: #{tpu_custom_call.1} parent=0
    #allocation2 [shape = 'u8[8192]{0}', space=vmem, size = 0x2000, scoped, tag = 'input window, operand 0, single buffered']
    #allocation3 [shape = 's32[1]{0}', space=sflag, size = 0x4, scoped, tag = 'scoped memory for tpu_custom_call.1']
    #allocation4 [shape = 'u8[8192]{0}', space=vmem, size = 0x2000, scoped, tag = 'input window, operand 1, single buffered']
    #allocation5 [shape = 's32[1]{0}', space=sflag, size = 0x4, scoped, tag = 'scoped memory for tpu_custom_call.1']
    %9 = vsyncpa [#allocation3], 0
    %10 = vsyncpa [#allocation5], 0
    // Predicated region
    $region2: #{tpu_custom_call.1} parent=1 // pred_check
      _
    $region3: #{tpu_custom_call.1} parent=1 // pred_check_branch
      %12 = sbr.rel (0) target = $region5
    $region4: #{tpu_custom_call.1} parent=1 // pred_region
      %s13 = sadd.s32 0, 0
      %p14 = scmp.lt.s32.totalorder %s13, 0
      %s15 = scalar_select %p14, %s13, 0
      %s16 = smul.u32 2, %s15
      %s18 = ssub.s32 256, 256
      %19 = vsyncadd [#allocation3], %s18
      %s20 = smul.addr %s16, 128
      %s21 = scalar_lea.hbm %s0, %s20
      %s23 = sshll.u32 [#allocation2], 4
      %s24 = int_to_ptr.vmem [resolvable:$true] %s23
      %26 = dma.hbm_to_vmem [thread:$0]  %s21, 256, %s24, [#allocation3]
    $region5: #{tpu_custom_call.1} parent=1 // pred_fallthru
      _
    // Predicated region
    $region6: #{tpu_custom_call.1} parent=1 // pred_check
      _
    $region7: #{tpu_custom_call.1} parent=1 // pred_check_branch
      %28 = sbr.rel (0) target = $region9
    $region8: #{tpu_custom_call.1} parent=1 // pred_region
      %s29 = sadd.s32 0, 0
      %p30 = scmp.lt.s32.totalorder %s29, 0
      %s31 = scalar_select %p30, %s29, 0
      %s32 = smul.u32 2, %s31
      %s34 = ssub.s32 256, 256
      %35 = vsyncadd [#allocation5], %s34
      %s36 = smul.addr %s32, 128
      %s37 = scalar_lea.hbm %s1, %s36
      %s39 = sshll.u32 [#allocation4], 4
      %s40 = int_to_ptr.vmem [resolvable:$true] %s39
      %42 = dma.hbm_to_vmem [thread:$0]  %s37, 256, %s40, [#allocation5]
    $region9: #{tpu_custom_call.1} parent=1 // pred_fallthru
      _
    // Predicated region
    $region10: #{tpu_custom_call.1} parent=1 // pred_check
      _
    $region11: #{tpu_custom_call.1} parent=1 // pred_check_branch
      %44 = sbr.rel (0) target = $region13
    $region12: #{tpu_custom_call.1} parent=1 // pred_region
      %45 = dma.done [#allocation3], 256
    $region13: #{tpu_custom_call.1} parent=1 // pred_fallthru
      _
    // Predicated region
    $region14: #{tpu_custom_call.1} parent=1 // pred_check
      _
    $region15: #{tpu_custom_call.1} parent=1 // pred_check_branch
      %47 = sbr.rel (0) target = $region17
    $region16: #{tpu_custom_call.1} parent=1 // pred_region
      %48 = dma.done [#allocation5], 256
    $region17: #{tpu_custom_call.1} parent=1 // pred_fallthru
      _
    %s49 = sadd.s32 0, 0
    %p50 = scmp.lt.s32.totalorder %s49, 0
    %s51 = scalar_select %p50, %s49, 0
    %s52 = smul.u32 2, %s51
    %s53 = sadd.s32 0, 0
    %p54 = scmp.lt.s32.totalorder %s53, 0
    %s55 = scalar_select %p54, %s53, 0
    %s56 = smul.u32 2, %s55
    %p57 = scmp.eq.s32.totalorder 0, 0
    // Predicated region
    $region18: #{tpu_custom_call.1} parent=1 // pred_check
      %p58 = pneg %p57
    $region19: #{tpu_custom_call.1} parent=1 // pred_check_branch
      %60 = sbr.rel (%p58) target = $region21
    $region20: #{tpu_custom_call.1} parent=1 // pred_region
      %vm61 = vcmask 7168
      %62 = vst.msk [vmem:[%s2] sm:$0xff] %vm61, 0.0
      %63 = vst.msk [vmem:[%s3] sm:$0xff] %vm61, 0.0
    $region21: #{tpu_custom_call.1} parent=1 // pred_fallthru
      _
    %v64 = vld [vmem:[#allocation2] sm:$0xff]
    %v65 = vld [vmem:[#allocation2 + $0x8] sm:$0xff]
    %v66 = vld [vmem:[#allocation4] sm:$0xff]
    %v67 = vld [vmem:[#allocation4 + $0x8] sm:$0xff]
    %v68 = vld [vmem:[%s2] sm:$0xff]
    %v69 = vmul.f32 %v64, %v66
    %v70 = vmul.f32 %v65, %v67
    %v71 = vadd.f32 %v69, %v70
    %72 = vadd.xlane.f32.xlu0 %v71
    %v73 = vpop.xlane.xlu0 %72
    %v74 = vadd.f32 %v68, %v73
    %vm75 = vcmask 7168
    %76 = vst.msk [vmem:[%s2] sm:$0xff] %vm75, %v74
    %v77 = vld [vmem:[%s3] sm:$0xff]
    %v78 = vadd.f32 %v64, %v66
    %v79 = vadd.f32 %v65, %v67
    %v80 = vadd.f32 %v78, %v79
    %81 = vadd.xlane.f32.xlu0 %v80
    %v82 = vpop.xlane.xlu0 %81
    %v83 = vadd.f32 %v77, %v82
    %84 = vst.msk [vmem:[%s3] sm:$0xff] %vm75, %v83
    // Predicated region
    $region22: #{tpu_custom_call.1} parent=1 // pred_check
      _
    $region23: #{tpu_custom_call.1} parent=1 // pred_check_branch
      %86 = sbr.rel (0) target = $region25
    $region24: #{tpu_custom_call.1} parent=1 // pred_region
      _
    $region25: #{tpu_custom_call.1} parent=1 // pred_fallthru
      _
    // Predicated region
    $region26: #{tpu_custom_call.1} parent=1 // pred_check
      _
    $region27: #{tpu_custom_call.1} parent=1 // pred_check_branch
      %88 = sbr.rel (0) target = $region29
    $region28: #{tpu_custom_call.1} parent=1 // pred_region
      _
    $region29: #{tpu_custom_call.1} parent=1 // pred_fallthru
      _
    // Predicated region
    $region30: #{tpu_custom_call.1} parent=1 // pred_check
      _
    $region31: #{tpu_custom_call.1} parent=1 // pred_check_branch
      %90 = sbr.rel (0) target = $region33
    $region32: #{tpu_custom_call.1} parent=1 // pred_region
      _
    $region33: #{tpu_custom_call.1} parent=1 // pred_fallthru
      _
    // Predicated region
    $region34: #{tpu_custom_call.1} parent=1 // pred_check
      _
    $region35: #{tpu_custom_call.1} parent=1 // pred_check_branch
      %92 = sbr.rel (0) target = $region37
    $region36: #{tpu_custom_call.1} parent=1 // pred_region
      _
    $region37: #{tpu_custom_call.1} parent=1 // pred_fallthru
      _
    %93 = vsyncpa [#allocation3], 1
    %94 = vsyncpa [#allocation5], 1

</llo_original>
